<compile_context>
chip_gen: v7x
topology: tpu7x:2x2x1
jax: 0.10.0
libtpu: 0.0.40
codegen_flags: <defaults>
</compile_context>

<pallas_src>
import numpy as np
import jax
import jax.numpy as jnp
from jax.experimental import pallas as pl
from jax.experimental.pallas import tpu as pltpu


# ----------------------------------------------------------------------------
# helpers
# ----------------------------------------------------------------------------
def _offsets(seg_shapes):
    """Flat offsets of each segment inside the concatenated operand buffer."""
    offs, cur = [], 0
    for s in seg_shapes:
        offs.append(cur)
        cur += int(np.prod(s))
    return offs, cur


def _round_up(x, m):
    return ((x + m - 1) // m) * m


def _vmem_capacity_bytes():
    """Physical VMEM of the current chip, with a conservative fallback."""
    try:
        info = pltpu.get_tpu_info()
        cap = getattr(info, "vmem_capacity_bytes", None)
        if cap:
            return int(cap)
    except Exception:
        pass
    return 64 * 1024 * 1024  # v7x has the smallest VMEM (64 MiB) -> safe floor


def _num_tensorcores():
    """TensorCores visible to one Pallas kernel (megacore v4/v5p, v7x -> 2)."""
    try:
        kind = str(getattr(jax.devices()[0], "device_kind", "")).lower()
        for tag in ("v4", "v5p", "v7"):
            if tag in kind:
                return 2
    except Exception:
        pass
    return 1


def _choose_tb(B, cap, num_tc):
    """Batch tile: as large as the VMEM budget allows, multiple of 8.

    On multi-TensorCore chips we guarantee >= num_tc grid steps (prefer an
    even multiple of num_tc) so the 'parallel' batch axis feeds every core;
    on single-TC chips we take the whole batch if it fits (no extra grid-step
    overhead for zero parallelism gain).
    """
    cap = max(8, (int(cap) // 8) * 8)
    if B <= 8:
        return B
    if num_tc >= 2 and B >= 2 * 8:
        per_core = -(-B // num_tc)  # ceil
        max_tb = min(cap, per_core)
    else:
        max_tb = min(cap, B)
    max_tb = max(8, (max_tb // 8) * 8)
    # pass 1: divides B evenly AND gives a step count that is a multiple of
    #         num_tc (balanced across cores)
    tb = max_tb
    while tb >= 8:
        if B % tb == 0 and (B // tb) % max(num_tc, 1) == 0:
            return tb
        tb -= 8
    # pass 2: just divides B evenly
    tb = max_tb
    while tb >= 8:
        if B % tb == 0:
            return tb
        tb -= 8
    return max_tb  # ragged last block handled by Pallas masking


# ----------------------------------------------------------------------------
# Fused kernel: FusedTP3 ('u_v_uv') + FusedTP4 ('u_v_uv_v') in one pallas_call
# ----------------------------------------------------------------------------
def make_fused_tp3_tp4(seg0, seg1, segw, seg_out0, seg_out1, paths3, paths4,
                       math_dtype=jnp.float32):
    off0, size0 = _offsets(seg0)
    off1, size1 = _offsets(seg1)
    offw, sizew = _offsets(segw)
    offo0, size_o0 = _offsets(seg_out0)
    offo1, size_o1 = _offsets(seg_out1)

    # Fused column layout: [ out0 columns | pad to 128 | out1 columns | pad ]
    O0_PAD = _round_up(max(size_o0, 1), 128)
    O1_PAD = _round_up(max(size_o1, 1), 128)
    COLS = O0_PAD + O1_PAD
    OUT1_COL = O0_PAD  # 128-aligned lane offset of output buffer 1

    # --- layer assignment: paths writing the same output segment go to
    #     successive layers so each output column is touched at most once per
    #     layer (then out = sum_k (x0@L_k)*(x1@R_k) is exact).
    def assign_layers(paths, io_pos):
        seen, layers = {}, []
        for p in paths:
            io = p[io_pos]
            k = seen.get(io, 0)
            seen[io] = k + 1
            layers.append(k)
        return layers, (max(layers) + 1 if layers else 0)

    lay3, n3 = assign_layers(paths3, 2)
    lay4, n4 = assign_layers(paths4, 3)
    NUM_LAYERS = max(n3, n4, 1)

    # Static selection / coefficient matrices (numpy, built once).
    L_static = np.zeros((NUM_LAYERS, size0, COLS), np.float32)  # x0-side
    R_static = np.zeros((NUM_LAYERS, size1, COLS), np.float32)  # x1-side (one-hot)

    # TP3 'u_v_uv': out0[:, offo0[io]+a*v+b] += c * x0[off0[i0]+a] * x1[off1[i1]+b]
    for p, (i0, i1, io, c) in enumerate(paths3):
        k = lay3[p]
        u, v = seg0[i0][0], seg1[i1][0]
        for a in range(u):
            for b in range(v):
                col = offo0[io] + a * v + b
                L_static[k, off0[i0] + a, col] += np.float32(c)
                R_static[k, off1[i1] + b, col] = 1.0

    # TP4 'u_v_uv_v': out1[:, offo1[io]+b] += c * x1[off1[i1]+b] *
    #                                         sum_a x0[off0[i0]+a] * w[iw][a,b]
    # The weight part of L is filled at call time from w; the x1 one-hot is static.
    w_slots = []
    for p, (i0, i1, iw, io, c) in enumerate(paths4):
        k = lay4[p]
        u, v = seg0[i0][0], seg1[i1][0]
        for b in range(v):
            R_static[k, off1[i1] + b, OUT1_COL + offo1[io] + b] = 1.0
        w_slots.append((k, i0, iw, io, c, u, v))

    R_const = jnp.asarray(R_static)

    def build_L(w):
        """Shared (batch-1) weights -> stacked (NUM_LAYERS, size0, COLS) blocks."""
        wf = w.reshape(-1).astype(math_dtype)
        L = jnp.asarray(L_static)
        for (k, i0, iw, io, c, u, v) in w_slots:
            wseg = wf[offw[iw]:offw[iw] + u * v].reshape(u, v) * np.float32(c)
            L = L.at[k, off0[i0]:off0[i0] + u,
                     OUT1_COL + offo1[io]:OUT1_COL + offo1[io] + v].add(wseg)
        return L

    # ---------------- kernel ----------------
    def kernel(x0_ref, x1_ref, l_ref, r_ref, o0_ref, o1_ref):
        x0 = x0_ref[...].astype(math_dtype)
        x1 = x1_ref[...].astype(math_dtype)

        acc = None
        for k in range(NUM_LAYERS):  # NUM_LAYERS is tiny (path multiplicity)
            left = jnp.dot(x0, l_ref[k], preferred_element_type=jnp.float32)
            right = jnp.dot(x1, r_ref[k], preferred_element_type=jnp.float32)
            term = left * right
            acc = term if acc is None else acc + term

        # One lane-dense store per output buffer; untouched segments are zero
        # because their L/R columns are zero (no explicit zero-fill needed).
        o0_ref[...] = acc[:, :size_o0].astype(o0_ref.dtype)
        o1_ref[...] = acc[:, OUT1_COL:OUT1_COL + size_o1].astype(o1_ref.dtype)

    # ---------------- wrapper ----------------
    def apply(x0, x1, w):
        if int(w.shape[0]) != 1:
            # TODO(synk): per-batch (non-shared) TP4 weights would need the L
            # block matrices built per row; not implemented here.
            raise NotImplementedError(
                "fused TP4 kernel expects shared (batch-1) weights")
        if int(w.shape[-1]) != sizew:
            raise ValueError(
                f"weight buffer has {int(w.shape[-1])} elements, expected {sizew}")

        B = max(int(x0.shape[0]), int(x1.shape[0]))
        L = build_L(w)

        # --- generation-aware VMEM sizing -------------------------------
        phys = _vmem_capacity_bytes()
        num_tc = _num_tensorcores()
        budget = max(8 * 1024 * 1024, (phys * 2) // 5)   # ~40% of physical for tiles
        fixed_bytes = 4 * NUM_LAYERS * (size0 + size1) * COLS * 2   # L + R (2x buffered)
        per_row = 4 * ((size0 + size1) * 2            # double-buffered inputs
                       + (size_o0 + size_o1) * 2      # double-buffered outputs
                       + 4 * COLS)                    # live acc/left/right (+slack)
        cap = max(8, (budget - fixed_bytes) // max(per_row, 1))
        TB = _choose_tb(B, cap, num_tc)
        grid = (pl.cdiv(B, TB),)

        tile_bytes = fixed_bytes + TB * per_row
        vmem_limit = int(min(phys * 3 // 4,
                             max(32 * 1024 * 1024, tile_bytes + (8 << 20))))

        def in_spec(x, n):
            if int(x.shape[0]) == 1:  # broadcast operand
                return pl.BlockSpec((1, n), lambda b: (0, 0))
            return pl.BlockSpec((TB, n), lambda b: (b, 0))

        flops = NUM_LAYERS * (2 * B * (size0 + size1) * COLS + 2 * B * COLS)
        bytes_acc = 4 * (B * (size0 + size1 + size_o0 + size_o1)
                         + NUM_LAYERS * (size0 + size1) * COLS)
        cost = pl.CostEstimate(flops=int(flops), transcendentals=0,
                               bytes_accessed=int(bytes_acc))

        out0, out1 = pl.pallas_call(
            kernel,
            out_shape=(jax.ShapeDtypeStruct((B, size_o0), math_dtype),
                       jax.ShapeDtypeStruct((B, size_o1), math_dtype)),
            grid=grid,
            in_specs=[in_spec(x0, size0),
                      in_spec(x1, size1),
                      pl.BlockSpec((NUM_LAYERS, size0, COLS), lambda b: (0, 0, 0)),
                      pl.BlockSpec((NUM_LAYERS, size1, COLS), lambda b: (0, 0, 0))],
            out_specs=(pl.BlockSpec((TB, size_o0), lambda b: (b, 0)),
                       pl.BlockSpec((TB, size_o1), lambda b: (b, 0))),
            compiler_params=pltpu.CompilerParams(
                dimension_semantics=("parallel",),
                vmem_limit_bytes=vmem_limit),
            cost_estimate=cost,
        )(x0, x1, L, R_const)

        return out0, out1

    return apply, (size_o0, size_o1)


# ----------------------------------------------------------------------------
# Module-level wrapper mirroring SegmentedPolynomialFusedTP.forward
# ----------------------------------------------------------------------------
class SegmentedPolynomialFusedTP:
    def __init__(self, num_inputs, input_sizes, output_sizes, ops,
                 output_dtype_map=None, math_dtype=jnp.float32,
                 name="segmented_polynomial"):
        # Fused TP only supports f32/f64 math; TPU kernel here uses f32.
        assert math_dtype == jnp.float32
        self.num_inputs = num_inputs
        self.num_outputs = len(output_sizes)
        self.input_sizes = list(input_sizes)
        self.out_size = list(output_sizes)
        self.math_dtype = math_dtype
        self.name = name
        default_map = [0 if num_inputs >= 1 else -1] * self.num_outputs
        self.dtypes = list(range(num_inputs)) + (
            default_map if output_dtype_map is None else output_dtype_map)
        # ops: list of (apply_fn, input_buffer_indices, output_buffer_indices)
        self.ops = ops

    def __call__(self, inputs, input_indices, output_shapes, output_indices):
        inputs = list(inputs)
        for i, (x, size) in enumerate(zip(inputs, self.input_sizes)):
            if x.ndim == 0:
                raise ValueError(f"Input {i} has no dimensions")
            if x.shape[-1] != size:
                raise ValueError(
                    f"Input {i} has shape {x.shape} but expected {size}.")
        # optional input gather
        for k, v in input_indices.items():
            inputs[k] = inputs[k][v]

        out_indices = [None] * self.num_outputs
        for k, v in output_indices.items():
            out_indices[k] = v
            assert k in output_shapes, \
                "output shapes must be provided for output indices"

        batch_size = 1
        for x in inputs:
            if x.shape[0] != 1:
                assert batch_size in (1, x.shape[0])
                batch_size = x.shape[0]

        outputs_dims = [
            (batch_size, s) if i not in output_shapes
            else (output_shapes[i].shape[0], s)
            for i, s in enumerate(self.out_size)
        ]
        # NOTE: mirrors the reference's zip(outputs_dims, self.dtypes)
        # truncation (output buffer i takes inputs[i].dtype), which is the
        # reference module's behaviour even when output_dtype_map is given.
        buffer_dtypes = [inputs[d].dtype
                         for d in self.dtypes[:self.num_outputs]]

        # lazily created output buffers (avoid zeros+add when an op fully
        # defines a buffer and no output indices are used)
        out_buffers = [None] * self.num_outputs

        for apply_fn, in_inds, b_outs in self.ops:
            results = apply_fn(*[inputs[j] for j in in_inds])
            if not isinstance(results, (tuple, list)):
                results = (results,)
            for out, b_out in zip(results, b_outs):
                out = out.astype(buffer_dtypes[b_out])
                idx = out_indices[b_out]
                target_rows = outputs_dims[b_out][0]
                if idx is not None:
                    if out.shape[0] == 1 and idx.shape[0] > 1:
                        out = jnp.broadcast_to(out, (idx.shape[0], out.shape[1]))
                    buf = out_buffers[b_out]
                    if buf is None:
                        buf = jnp.zeros(outputs_dims[b_out], buffer_dtypes[b_out])
                    out_buffers[b_out] = buf.at[idx].add(out)
                else:
                    if out.shape[0] == target_rows:
                        contrib = out
                    elif target_rows == 1:
                        contrib = out.sum(axis=0, keepdims=True)
                    elif out.shape[0] == 1:
                        contrib = jnp.broadcast_to(out, outputs_dims[b_out])
                    else:
                        raise ValueError(
                            "Input/output batch size mismatch "
                            f"{outputs_dims[b_out]} vs {out.shape}.")
                    if out_buffers[b_out] is None:
                        out_buffers[b_out] = contrib
                    else:
                        out_buffers[b_out] = out_buffers[b_out] + contrib

        return [
            b if b is not None else jnp.zeros(outputs_dims[i], buffer_dtypes[i])
            for i, b in enumerate(out_buffers)
        ]


# ----------------------------------------------------------------------------
# pure numpy references (validation only)
# ----------------------------------------------------------------------------
def ref_tp3(x0, x1, seg0, seg1, seg_out, paths):
    off0, _ = _offsets(seg0)
    off1, _ = _offsets(seg1)
    offo, so = _offsets(seg_out)
    x0 = np.asarray(x0, np.float32)
    x1 = np.asarray(x1, np.float32)
    B = max(x0.shape[0], x1.shape[0])
    out = np.zeros((B, so), np.float32)
    for (i0, i1, io, c) in paths:
        (u,) = seg0[i0]
        (v,) = seg1[i1]
        a = x0[:, off0[i0]:off0[i0] + u]
        b = x1[:, off1[i1]:off1[i1] + v]
        contrib = c * a[:, :, None] * b[:, None, :]
        out[:, offo[io]:offo[io] + u * v] += contrib.reshape(
            contrib.shape[0], u * v)
    return out


def ref_tp4(x0, x1, w, seg0, seg1, segw, seg_out, paths):
    off0, _ = _offsets(seg0)
    off1, _ = _offsets(seg1)
    offw, _ = _offsets(segw)
    offo, so = _offsets(seg_out)
    x0 = np.asarray(x0, np.float32)
    x1 = np.asarray(x1, np.float32)
    w = np.asarray(w, np.float32)
    B = max(x0.shape[0], x1.shape[0], w.shape[0])
    out = np.zeros((B, so), np.float32)
    for (i0, i1, iw, io, c) in paths:
        (u,) = seg0[i0]
        (v,) = seg1[i1]
        a = x0[:, off0[i0]:off0[i0] + u]
        b = x1[:, off1[i1]:off1[i1] + v]
        ws = w[:, offw[iw]:offw[iw] + u * v].reshape(-1, u, v)
        tmp = np.sum(a[:, :, None] * ws, axis=1)
        out[:, offo[io]:offo[io] + v] += c * b * tmp
    return out


# ----------------------------------------------------------------------------
if __name__ == "__main__":
    # synthetic segmented polynomial: 3 inputs, 2 outputs, 2 operations
    B = 16
    seg0 = [(8,), (8,)]                   # input 0, size 16
    seg1 = [(8,), (8,)]                   # input 1, size 16
    segw = [(8, 8), (8, 8)]               # input 2 (shared weights), size 128
    seg_out0 = [(8, 8), (8, 8), (8, 8)]   # output 0, size 192
    seg_out1 = [(8,), (8,)]               # output 1, size 16

    # path_indices / path_coefficients (deterministic, defined in-script)
    paths0 = [(0, 0, 0, 1.0), (0, 1, 1, 0.5), (1, 0, 1, -0.25), (1, 1, 2, 2.0)]
    paths1 = [(0, 0, 0, 0, 1.0), (1, 1, 1, 1, 0.75), (0, 1, 0, 1, -0.5)]

    fused, (size_out0, size_out1) = make_fused_tp3_tp4(
        seg0, seg1, segw, seg_out0, seg_out1, paths0, paths1)

    module = SegmentedPolynomialFusedTP(
        num_inputs=3,
        input_sizes=[16, 16, 128],
        output_sizes=[size_out0, size_out1],
        # one fused op: FusedTP3('u_v_uv') -> buffer 0, FusedTP4('u_v_uv_v') -> buffer 1
        ops=[(fused, [0, 1, 2], [0, 1])],
    )

    key = jax.random.PRNGKey(0)
    k0, k1, k2 = jax.random.split(key, 3)
    x0 = jax.random.normal(k0, (B, 16), jnp.float32)
    x1 = jax.random.normal(k1, (B, 16), jnp.float32)
    w = jax.random.normal(k2, (1, 128), jnp.float32)   # batch-broadcast weights

    # TODO(synk): generic cue dispatch/permutation ('permute_all_but_last') for
    # arbitrary subscripts is not reimplemented; this instantiates two concrete
    # supported targets ('u_v_uv', 'u_v_uv_v').
    outs = module([x0, x1, w], {}, {}, {})
    outs = jax.block_until_ready(outs)

    r0 = ref_tp3(x0, x1, seg0, seg1, seg_out0, paths0)
    r1 = ref_tp4(x0, x1, w, seg0, seg1, segw, seg_out1, paths1)
    np.testing.assert_allclose(np.asarray(outs[0]), r0, rtol=1e-5, atol=1e-5)
    np.testing.assert_allclose(np.asarray(outs[1]), r1, rtol=1e-5, atol=1e-5)

    print("KERNEL_OK")
</pallas_src>

<mosaic_0001>
module attributes {stable_mosaic.version = 11 : i64} {
  func.func @kernel(%arg0: i32, %arg1: memref<16x16xf32, #tpu.memory_space<vmem>>, %arg2: memref<16x16xf32, #tpu.memory_space<vmem>>, %arg3: memref<2x16x384xf32, #tpu.memory_space<vmem>>, %arg4: memref<2x16x384xf32, #tpu.memory_space<vmem>>, %arg5: memref<16x192xf32, #tpu.memory_space<vmem>>, %arg6: memref<16x16xf32, #tpu.memory_space<vmem>>) attributes {dimension_semantics = [#tpu.dimension_semantics<parallel>], iteration_bounds = array<i64: 1>, scalar_prefetch = 0 : i64, scratch_operands = 0 : i64, tpu.core_type = #tpu.core_type<tc>, window_params = [{transform_indices = @transform_0, window_bounds = array<i64: 16, 16>}, {transform_indices = @transform_1, window_bounds = array<i64: 16, 16>}, {pipeline_mode = #tpu.pipeline_mode<synchronous>, transform_indices = @transform_2, window_bounds = array<i64: 2, 16, 384>}, {pipeline_mode = #tpu.pipeline_mode<synchronous>, transform_indices = @transform_3, window_bounds = array<i64: 2, 16, 384>}, {transform_indices = @transform_4, window_bounds = array<i64: 16, 192>}, {transform_indices = @transform_5, window_bounds = array<i64: 16, 16>}]} {
    %c0 = arith.constant 0 : index
    %c0_0 = arith.constant 0 : index
    %0 = vector.load %arg1[%c0, %c0_0] : memref<16x16xf32, #tpu.memory_space<vmem>>, vector<16x16xf32>
    %c0_1 = arith.constant 0 : index
    %c0_2 = arith.constant 0 : index
    %1 = vector.load %arg2[%c0_1, %c0_2] : memref<16x16xf32, #tpu.memory_space<vmem>>, vector<16x16xf32>
    %c0_3 = arith.constant 0 : index
    %c0_4 = arith.constant 0 : index
    %c0_5 = arith.constant 0 : index
    %2 = vector.load %arg3[%c0_3, %c0_4, %c0_5] : memref<2x16x384xf32, #tpu.memory_space<vmem>>, vector<1x16x384xf32>
    %3 = vector.shape_cast %2 : vector<1x16x384xf32> to vector<16x384xf32>
    %cst = arith.constant dense<0.000000e+00> : vector<16x384xf32>
    %4 = tpu.matmul %0, %3, %cst {dimension_numbers = #tpu.dot_dimension_numbers<[1], [0], [0], [1], [0, 0, 1, 1], [], []>} : vector<16x16xf32>, vector<16x384xf32>, vector<16x384xf32> -> vector<16x384xf32>
    %c0_6 = arith.constant 0 : index
    %c0_7 = arith.constant 0 : index
    %c0_8 = arith.constant 0 : index
    %5 = vector.load %arg4[%c0_6, %c0_7, %c0_8] : memref<2x16x384xf32, #tpu.memory_space<vmem>>, vector<1x16x384xf32>
    %6 = vector.shape_cast %5 : vector<1x16x384xf32> to vector<16x384xf32>
    %cst_9 = arith.constant dense<0.000000e+00> : vector<16x384xf32>
    %7 = tpu.matmul %1, %6, %cst_9 {dimension_numbers = #tpu.dot_dimension_numbers<[1], [0], [0], [1], [0, 0, 1, 1], [], []>} : vector<16x16xf32>, vector<16x384xf32>, vector<16x384xf32> -> vector<16x384xf32>
    %8 = arith.mulf %4, %7 : vector<16x384xf32>
    %c1 = arith.constant 1 : index
    %c0_10 = arith.constant 0 : index
    %c0_11 = arith.constant 0 : index
    %9 = vector.load %arg3[%c1, %c0_10, %c0_11] : memref<2x16x384xf32, #tpu.memory_space<vmem>>, vector<1x16x384xf32>
    %10 = vector.shape_cast %9 : vector<1x16x384xf32> to vector<16x384xf32>
    %cst_12 = arith.constant dense<0.000000e+00> : vector<16x384xf32>
    %11 = tpu.matmul %0, %10, %cst_12 {dimension_numbers = #tpu.dot_dimension_numbers<[1], [0], [0], [1], [0, 0, 1, 1], [], []>} : vector<16x16xf32>, vector<16x384xf32>, vector<16x384xf32> -> vector<16x384xf32>
    %c1_13 = arith.constant 1 : index
    %c0_14 = arith.constant 0 : index
    %c0_15 = arith.constant 0 : index
    %12 = vector.load %arg4[%c1_13, %c0_14, %c0_15] : memref<2x16x384xf32, #tpu.memory_space<vmem>>, vector<1x16x384xf32>
    %13 = vector.shape_cast %12 : vector<1x16x384xf32> to vector<16x384xf32>
    %cst_16 = arith.constant dense<0.000000e+00> : vector<16x384xf32>
    %14 = tpu.matmul %1, %13, %cst_16 {dimension_numbers = #tpu.dot_dimension_numbers<[1], [0], [0], [1], [0, 0, 1, 1], [], []>} : vector<16x16xf32>, vector<16x384xf32>, vector<16x384xf32> -> vector<16x384xf32>
    %15 = arith.mulf %11, %14 : vector<16x384xf32>
    %16 = arith.addf %8, %15 : vector<16x384xf32>
    %17 = vector.extract_strided_slice %16 {offsets = [0, 0], sizes = [16, 192], strides = [1, 1]} : vector<16x384xf32> to vector<16x192xf32>
    %c0_17 = arith.constant 0 : index
    %c0_18 = arith.constant 0 : index
    %18 = vector.load %arg5[%c0_17, %c0_18] : memref<16x192xf32, #tpu.memory_space<vmem>>, vector<16x192xf32>
    tpu.vector_store %arg5[%c0_17, %c0_18], %17 {strides = array<i32>} : memref<16x192xf32, #tpu.memory_space<vmem>>, vector<16x192xf32>,
    %19 = vector.extract_strided_slice %16 {offsets = [0, 256], sizes = [16, 16], strides = [1, 1]} : vector<16x384xf32> to vector<16x16xf32>
    %c0_19 = arith.constant 0 : index
    %c0_20 = arith.constant 0 : index
    %20 = vector.load %arg6[%c0_19, %c0_20] : memref<16x16xf32, #tpu.memory_space<vmem>>, vector<16x16xf32>
    tpu.vector_store %arg6[%c0_19, %c0_20], %19 {strides = array<i32>} : memref<16x16xf32, #tpu.memory_space<vmem>>, vector<16x16xf32>,
    return
  }
  func.func @transform_0(%arg0: i32) -> (i32, i32) {
    %c0_i32 = arith.constant 0 : i32
    %c0_i32_0 = arith.constant 0 : i32
    return %arg0, %c0_i32 : i32, i32
  }
  func.func @transform_1(%arg0: i32) -> (i32, i32) {
    %c0_i32 = arith.constant 0 : i32
    %c0_i32_0 = arith.constant 0 : i32
    return %arg0, %c0_i32 : i32, i32
  }
  func.func @transform_2(%arg0: i32) -> (i32, i32, i32) {
    %c0_i32 = arith.constant 0 : i32
    %c0_i32_0 = arith.constant 0 : i32
    %c0_i32_1 = arith.constant 0 : i32
    %c0_i32_2 = arith.constant 0 : i32
    return %c0_i32, %c0_i32_0, %c0_i32_1 : i32, i32, i32
  }
  func.func @transform_3(%arg0: i32) -> (i32, i32, i32) {
    %c0_i32 = arith.constant 0 : i32
    %c0_i32_0 = arith.constant 0 : i32
    %c0_i32_1 = arith.constant 0 : i32
    %c0_i32_2 = arith.constant 0 : i32
    return %c0_i32, %c0_i32_0, %c0_i32_1 : i32, i32, i32
  }
  func.func @transform_4(%arg0: i32) -> (i32, i32) {
    %c0_i32 = arith.constant 0 : i32
    %c0_i32_0 = arith.constant 0 : i32
    return %arg0, %c0_i32 : i32, i32
  }
  func.func @transform_5(%arg0: i32) -> (i32, i32) {
    %c0_i32 = arith.constant 0 : i32
    %c0_i32_0 = arith.constant 0 : i32
    return %arg0, %c0_i32 : i32, i32
  }
}

</mosaic_0001>

<llo_original>
// kernel: tpu_custom_call.1
$region0: #{tpu_custom_call.1}
  #allocation0 [shape = 'u32[]', space=smem, size = 0x4, offset = 0x4, fixed_abs, tag = 'smem constant byte address 0x4 - core index']
  #allocation1 [shape = 'u32[144,128]{1,0:T(1,128)}', space=vmem, size = 0x12000, scoped, tag = 'internal scratch']
  %s0 = inlined_call_operand.hbm [shape: f32[16,16], index: 0, kind: input, shape index: {}]
  %s1 = inlined_call_operand.hbm [shape: f32[16,16], index: 1, kind: input, shape index: {}]
  %s2 = inlined_call_operand.hbm [shape: f32[2,16,384], index: 2, kind: input, shape index: {}]
  %s3 = inlined_call_operand.hbm [shape: f32[2,16,384], index: 3, kind: input, shape index: {}]
  %s4 = inlined_call_operand.hbm [shape: f32[16,192], index: 4, kind: output, shape index: {0}]
  %s5 = inlined_call_operand.hbm [shape: f32[16,16], index: 5, kind: output, shape index: {1}]
  %6 = xla_tuple %s4, %s5
  %s7 = sld [smem:[#allocation0]]
  $region50: #{tpu_custom_call.1} parent=0
    _
  %s9 = ssub.s32 1, %s7
  %s10 = scalar_select 0, %s9, %s7
  $region1: #{tpu_custom_call.1} parent=0
    #allocation2 [shape = 'u8[8192]{0}', space=vmem, size = 0x2000, scoped, tag = 'input window, operand 0, single buffered']
    #allocation3 [shape = 's32[1]{0}', space=sflag, size = 0x4, scoped, tag = 'scoped memory for tpu_custom_call.1']
    #allocation4 [shape = 's32[1]{0}', space=sflag, size = 0x4, scoped, tag = 'scoped memory for tpu_custom_call.1']
    #allocation5 [shape = 'u8[8192]{0}', space=vmem, size = 0x2000, scoped, tag = 'input window, operand 1, single buffered']
    #allocation6 [shape = 's32[1]{0}', space=sflag, size = 0x4, scoped, tag = 'scoped memory for tpu_custom_call.1']
    #allocation7 [shape = 'u8[49152]{0}', space=vmem, size = 0xc000, scoped, tag = 'input window, operand 2, single buffered']
    #allocation8 [shape = 'u8[49152]{0}', space=vmem, size = 0xc000, scoped, tag = 'input window, operand 3, single buffered']
    #allocation9 [shape = 's32[1]{0}', space=sflag, size = 0x4, scoped, tag = 'scoped memory for tpu_custom_call.1']
    #allocation10 [shape = 'u8[16384]{0}', space=vmem, size = 0x4000, scoped, tag = 'output window, operand 0, single buffered']
    #allocation11 [shape = 'u8[8192]{0}', space=vmem, size = 0x2000, scoped, tag = 'output window, operand 1, single buffered']
    #allocation12 [shape = 's32[1]{0}', space=sflag, size = 0x4, scoped, tag = 'scoped memory for tpu_custom_call.1']
    %11 = vsyncpa [#allocation3], 0
    %12 = vsyncpa [#allocation6], 0
    %13 = vsyncpa [#allocation9], 0
    %14 = vsyncpa [#allocation4], 0
    %15 = vsyncpa [#allocation12], 0
    // Predicated region
    $region2: #{tpu_custom_call.1} parent=1 // pred_check
      _
    $region3: #{tpu_custom_call.1} parent=1 // pred_check_branch
      %17 = sbr.rel (0) target = $region5
    $region4: #{tpu_custom_call.1} parent=1 // pred_region
      %s19 = ssub.s32 256, 256
      %20 = vsyncadd [#allocation3], %s19
      %s21 = sshll.u32 [#allocation2], 4
      %s22 = int_to_ptr.vmem [resolvable:$true] %s21
      %27 = dma.hbm_to_vmem [thread:$0]  %s0, 256, %s22, [#allocation3], 128, 128, 8
    $region5: #{tpu_custom_call.1} parent=1 // pred_fallthru
      _
    // Predicated region
    $region6: #{tpu_custom_call.1} parent=1 // pred_check
      _
    $region7: #{tpu_custom_call.1} parent=1 // pred_check_branch
      %29 = sbr.rel (0) target = $region9
    $region8: #{tpu_custom_call.1} parent=1 // pred_region
      %s31 = ssub.s32 256, 256
      %32 = vsyncadd [#allocation6], %s31
      %s33 = sshll.u32 [#allocation5], 4
      %s34 = int_to_ptr.vmem [resolvable:$true] %s33
      %39 = dma.hbm_to_vmem [thread:$0]  %s1, 256, %s34, [#allocation6], 128, 128, 8
    $region9: #{tpu_custom_call.1} parent=1 // pred_fallthru
      _
    // Predicated region
    $region10: #{tpu_custom_call.1} parent=1 // pred_check
      _
    $region11: #{tpu_custom_call.1} parent=1 // pred_check_branch
      %41 = sbr.rel (0) target = $region13
    $region12: #{tpu_custom_call.1} parent=1 // pred_region
      %s43 = ssub.s32 1536, 1536
      %44 = vsyncadd [#allocation6], %s43
      %s45 = sshll.u32 [#allocation7], 4
      %s46 = int_to_ptr.vmem [resolvable:$true] %s45
      %51 = dma.hbm_to_vmem [thread:$0]  %s2, 1536, %s46, [#allocation6], 384, 384, 24
    $region13: #{tpu_custom_call.1} parent=1 // pred_fallthru
      _
    // Predicated region
    $region14: #{tpu_custom_call.1} parent=1 // pred_check
      _
    $region15: #{tpu_custom_call.1} parent=1 // pred_check_branch
      %53 = sbr.rel (0) target = $region17
    $region16: #{tpu_custom_call.1} parent=1 // pred_region
      %s55 = ssub.s32 1536, 1536
      %56 = vsyncadd [#allocation9], %s55
      %s57 = sshll.u32 [#allocation8], 4
      %s58 = int_to_ptr.vmem [resolvable:$true] %s57
      %63 = dma.hbm_to_vmem [thread:$0]  %s3, 1536, %s58, [#allocation9], 384, 384, 24
    $region17: #{tpu_custom_call.1} parent=1 // pred_fallthru
      _
    // Predicated region
    $region18: #{tpu_custom_call.1} parent=1 // pred_check
      _
    $region19: #{tpu_custom_call.1} parent=1 // pred_check_branch
      %65 = sbr.rel (0) target = $region21
    $region20: #{tpu_custom_call.1} parent=1 // pred_region
      %66 = dma.done [#allocation3], 256
    $region21: #{tpu_custom_call.1} parent=1 // pred_fallthru
      _
    // Predicated region
    $region22: #{tpu_custom_call.1} parent=1 // pred_check
      _
    $region23: #{tpu_custom_call.1} parent=1 // pred_check_branch
      %68 = sbr.rel (0) target = $region25
    $region24: #{tpu_custom_call.1} parent=1 // pred_region
      %69 = dma.done [#allocation6], 256
    $region25: #{tpu_custom_call.1} parent=1 // pred_fallthru
      _
    // Predicated region
    $region26: #{tpu_custom_call.1} parent=1 // pred_check
      _
    $region27: #{tpu_custom_call.1} parent=1 // pred_check_branch
      %71 = sbr.rel (0) target = $region29
    $region28: #{tpu_custom_call.1} parent=1 // pred_region
      %72 = dma.done [#allocation6], 1536
    $region29: #{tpu_custom_call.1} parent=1 // pred_fallthru
      _
    // Predicated region
    $region30: #{tpu_custom_call.1} parent=1 // pred_check
      _
    $region31: #{tpu_custom_call.1} parent=1 // pred_check_branch
      %74 = sbr.rel (0) target = $region33
    $region32: #{tpu_custom_call.1} parent=1 // pred_region
      %75 = dma.done [#allocation9], 1536
    $region33: #{tpu_custom_call.1} parent=1 // pred_fallthru
      _
    %v76 = vld [vmem:[#allocation2] sm:$0xff]
    %v77 = vld [vmem:[#allocation2 + $0x8] sm:$0xff]
    %v78 = vld [vmem:[#allocation5] sm:$0xff]
    %v79 = vld [vmem:[#allocation5 + $0x8] sm:$0xff]
    %v80 = vld [vmem:[#allocation7] sm:$0xff]
    %v81 = vld [vmem:[#allocation7 + $0x8] sm:$0xff]
    %v82 = vld [vmem:[#allocation7 + $0x10] sm:$0xff]
    %v83 = vld [vmem:[#allocation7 + $0x18] sm:$0xff]
    %v84 = vld [vmem:[#allocation7 + $0x20] sm:$0xff]
    %v85 = vld [vmem:[#allocation7 + $0x28] sm:$0xff]
    %vm86 = vcmask 130048
    %v88 = vsel %vm86, %v76, 0
    %v91 = vsel %vm86, %v77, 0
    %93 = vmatprep.subr.mxu0 %v81
    %94 = vmatpush1.msra.mxu0 %v80
    %95 = vmatprep.subr.mxu0 %v84
    %96 = vmatpush1.msra.mxu0 %v83
    %97 = vmatprep.subr.mxu0 0.0
    %98 = vmatpush1.msra.mxu0 0.0
    %99 = vmatprep.subr.mxu0 0.0
    %100 = vmatpush1.msra.mxu0 0.0
    %101 = vmatprep.subr.mxu0 0.0
    %102 = vmatpush1.msra.mxu0 0.0
    %103 = vmatprep.subr.mxu0 0.0
    %104 = vmatpush1.msra.mxu0 0.0
    %105 = vmatprep.subr.mxu0 0.0
    %106 = vmatpush1.msra.mxu0 0.0
    %107 = vmatprep.subr.mxu0 0.0
    %108 = vmatpush1.msra.mxu0 0.0
    %109 = vmatprep.subr.mxu0 0.0
    %110 = vmatpush1.msra.mxu0 0.0
    %111 = vmatprep.subr.mxu0 0.0
    %112 = vmatpush1.msra.mxu0 0.0
    %113 = vmatprep.subr.mxu0 0.0
    %114 = vmatpush1.msra.mxu0 0.0
    %115 = vmatprep.subr.mxu0 0.0
    %116 = vmatpush1.msra.mxu0 0.0
    %117 = vmatprep.subr.mxu0 0.0
    %118 = vmatpush1.msra.mxu0 0.0
    %119 = vmatprep.subr.mxu0 0.0
    %120 = vmatpush1.msra.mxu0 0.0
    %121 = vmatprep.subr.mxu0 0.0
    %122 = vmatpush1.msra.mxu0 0.0
    %123 = vmatprep.subr.mxu0 0.0
    %124 = vmatpush1.msra.mxu0 0.0
    %125 = vmatprep.subr.mxu0 0.0
    %126 = vmatpush1.msra.mxu0 0.0
    %127 = vmatprep.subr.mxu0 0.0
    %128 = vmatpush1.msra.mxu0 0.0
    %129 = vmatprep.subr.mxu0 0.0
    %130 = vmatpush1.msra.mxu0 0.0
    %131 = vmatprep.subr.mxu0 0.0
    %132 = vmatpush1.msra.mxu0 0.0
    %133 = vmatprep.subr.mxu0 0.0
    %134 = vmatpush1.msra.mxu0 0.0
    %135 = vmatprep.subr.mxu0 0.0
    %136 = vmatpush1.msra.mxu0 0.0
    %137 = vmatprep.subr.mxu0 0.0
    %138 = vmatpush1.msra.mxu0 0.0
    %139 = vmatprep.subr.mxu0 0.0
    %140 = vmatpush1.msra.mxu0 0.0
    %141 = vmatprep.subr.mxu0 0.0
    %142 = vmatpush1.msra.mxu0 0.0
    %143 = vmatprep.subr.mxu0 0.0
    %144 = vmatpush1.msra.mxu0 0.0
    %145 = vmatprep.subr.mxu0 0.0
    %146 = vmatpush1.msra.mxu0 0.0
    %147 = vmatprep.subr.mxu0 0.0
    %148 = vmatpush1.msra.mxu0 0.0
    %149 = vmatprep.subr.mxu0 0.0
    %150 = vmatpush1.msra.mxu0 0.0
    %151 = vmatprep.subr.mxu0 0.0
    %152 = vmatpush1.msra.mxu0 0.0
    %153 = vmatprep.subr.mxu0 0.0
    %154 = vmatpush1.msra.mxu0 0.0
    %155 = vmatprep.subr.mxu0 0.0
    %156 = vmatpush1.msra.mxu0 0.0
    %157 = vmatprep.mubr.f32.mxu0 0.0
    %158 = vmatmul.mubr.f32.gmra.mrb[0].mxu0 %v88
    %v159 = vpop.f32.mrb[0].mxu0
    %v160 = vadd.f32 0.0, %v159
    %v161 = vpop.f32.mrb[0].mxu0
    %v162 = vadd.f32 0.0, %v161
    %163 = vmatprep.mubr.f32.mxu0 0.0
    %164 = vmatmul.mubr.f32.gmra.mrb[0].mxu0 %v91
    %v165 = vpop.f32.mrb[0].mxu0
    %v166 = vadd.f32 0.0, %v165
    %v167 = vpop.f32.mrb[0].mxu0
    %v168 = vadd.f32 0.0, %v167
    %169 = vdwg.mxu0
    %170 = vmatprep.subr.mxu0 0.0
    %171 = vmatpush1.msra.mxu0 %v82
    %172 = vmatprep.subr.mxu0 0.0
    %173 = vmatpush1.msra.mxu0 %v85
    %174 = vmatprep.subr.mxu0 0.0
    %175 = vmatpush1.msra.mxu0 0.0
    %176 = vmatprep.subr.mxu0 0.0
    %177 = vmatpush1.msra.mxu0 0.0
    %178 = vmatprep.subr.mxu0 0.0
    %179 = vmatpush1.msra.mxu0 0.0
    %180 = vmatprep.subr.mxu0 0.0
    %181 = vmatpush1.msra.mxu0 0.0
    %182 = vmatprep.subr.mxu0 0.0
    %183 = vmatpush1.msra.mxu0 0.0
    %184 = vmatprep.subr.mxu0 0.0
    %185 = vmatpush1.msra.mxu0 0.0
    %186 = vmatprep.subr.mxu0 0.0
    %187 = vmatpush1.msra.mxu0 0.0
    %188 = vmatprep.subr.mxu0 0.0
    %189 = vmatpush1.msra.mxu0 0.0
    %190 = vmatprep.subr.mxu0 0.0
    %191 = vmatpush1.msra.mxu0 0.0
    %192 = vmatprep.subr.mxu0 0.0
    %193 = vmatpush1.msra.mxu0 0.0
    %194 = vmatprep.subr.mxu0 0.0
    %195 = vmatpush1.msra.mxu0 0.0
    %196 = vmatprep.subr.mxu0 0.0
    %197 = vmatpush1.msra.mxu0 0.0
    %198 = vmatprep.subr.mxu0 0.0
    %199 = vmatpush1.msra.mxu0 0.0
    %200 = vmatprep.subr.mxu0 0.0
    %201 = vmatpush1.msra.mxu0 0.0
    %202 = vmatprep.subr.mxu0 0.0
    %203 = vmatpush1.msra.mxu0 0.0
    %204 = vmatprep.subr.mxu0 0.0
    %205 = vmatpush1.msra.mxu0 0.0
    %206 = vmatprep.subr.mxu0 0.0
    %207 = vmatpush1.msra.mxu0 0.0
    %208 = vmatprep.subr.mxu0 0.0
    %209 = vmatpush1.msra.mxu0 0.0
    %210 = vmatprep.subr.mxu0 0.0
    %211 = vmatpush1.msra.mxu0 0.0
    %212 = vmatprep.subr.mxu0 0.0
    %213 = vmatpush1.msra.mxu0 0.0
    %214 = vmatprep.subr.mxu0 0.0
    %215 = vmatpush1.msra.mxu0 0.0
    %216 = vmatprep.subr.mxu0 0.0
    %217 = vmatpush1.msra.mxu0 0.0
    %218 = vmatprep.subr.mxu0 0.0
    %219 = vmatpush1.msra.mxu0 0.0
    %220 = vmatprep.subr.mxu0 0.0
    %221 = vmatpush1.msra.mxu0 0.0
    %222 = vmatprep.subr.mxu0 0.0
    %223 = vmatpush1.msra.mxu0 0.0
    %224 = vmatprep.subr.mxu0 0.0
    %225 = vmatpush1.msra.mxu0 0.0
    %226 = vmatprep.subr.mxu0 0.0
    %227 = vmatpush1.msra.mxu0 0.0
    %228 = vmatprep.subr.mxu0 0.0
    %229 = vmatpush1.msra.mxu0 0.0
    %230 = vmatprep.subr.mxu0 0.0
    %231 = vmatpush1.msra.mxu0 0.0
    %232 = vmatprep.subr.mxu0 0.0
    %233 = vmatpush1.msra.mxu0 0.0
    %234 = vmatprep.mubr.f32.mxu0 0.0
    %235 = vmatmul.mubr.f32.gmra.mrb[0].mxu0 %v88
    %v236 = vpop.f32.mrb[0].mxu0
    %v237 = vadd.f32 0.0, %v236
    %v238 = vpop.f32.mrb[0].mxu0
    %239 = vmatprep.mubr.f32.mxu0 0.0
    %240 = vmatmul.mubr.f32.gmra.mrb[0].mxu0 %v91
    %v241 = vpop.f32.mrb[0].mxu0
    %v242 = vadd.f32 0.0, %v241
    %v243 = vpop.f32.mrb[0].mxu0
    %244 = vdwg.mxu0
    %v245 = vld [vmem:[#allocation8] sm:$0xff]
    %v246 = vld [vmem:[#allocation8 + $0x8] sm:$0xff]
    %v247 = vld [vmem:[#allocation8 + $0x10] sm:$0xff]
    %v248 = vld [vmem:[#allocation8 + $0x18] sm:$0xff]
    %v249 = vld [vmem:[#allocation8 + $0x20] sm:$0xff]
    %v250 = vld [vmem:[#allocation8 + $0x28] sm:$0xff]
    %v252 = vsel %vm86, %v78, 0
    %v255 = vsel %vm86, %v79, 0
    %257 = vmatprep.subr.mxu0 %v246
    %258 = vmatpush1.msra.mxu0 %v245
    %259 = vmatprep.subr.mxu0 %v249
    %260 = vmatpush1.msra.mxu0 %v248
    %261 = vmatprep.subr.mxu0 0.0
    %262 = vmatpush1.msra.mxu0 0.0
    %263 = vmatprep.subr.mxu0 0.0
    %264 = vmatpush1.msra.mxu0 0.0
    %265 = vmatprep.subr.mxu0 0.0
    %266 = vmatpush1.msra.mxu0 0.0
    %267 = vmatprep.subr.mxu0 0.0
    %268 = vmatpush1.msra.mxu0 0.0
    %269 = vmatprep.subr.mxu0 0.0
    %270 = vmatpush1.msra.mxu0 0.0
    %271 = vmatprep.subr.mxu0 0.0
    %272 = vmatpush1.msra.mxu0 0.0
    %273 = vmatprep.subr.mxu0 0.0
    %274 = vmatpush1.msra.mxu0 0.0
    %275 = vmatprep.subr.mxu0 0.0
    %276 = vmatpush1.msra.mxu0 0.0
    %277 = vmatprep.subr.mxu0 0.0
    %278 = vmatpush1.msra.mxu0 0.0
    %279 = vmatprep.subr.mxu0 0.0
    %280 = vmatpush1.msra.mxu0 0.0
    %281 = vmatprep.subr.mxu0 0.0
    %282 = vmatpush1.msra.mxu0 0.0
    %283 = vmatprep.subr.mxu0 0.0
    %284 = vmatpush1.msra.mxu0 0.0
    %285 = vmatprep.subr.mxu0 0.0
    %286 = vmatpush1.msra.mxu0 0.0
    %287 = vmatprep.subr.mxu0 0.0
    %288 = vmatpush1.msra.mxu0 0.0
    %289 = vmatprep.subr.mxu0 0.0
    %290 = vmatpush1.msra.mxu0 0.0
    %291 = vmatprep.subr.mxu0 0.0
    %292 = vmatpush1.msra.mxu0 0.0
    %293 = vmatprep.subr.mxu0 0.0
    %294 = vmatpush1.msra.mxu0 0.0
    %295 = vmatprep.subr.mxu0 0.0
    %296 = vmatpush1.msra.mxu0 0.0
    %297 = vmatprep.subr.mxu0 0.0
    %298 = vmatpush1.msra.mxu0 0.0
    %299 = vmatprep.subr.mxu0 0.0
    %300 = vmatpush1.msra.mxu0 0.0
    %301 = vmatprep.subr.mxu0 0.0
    %302 = vmatpush1.msra.mxu0 0.0
    %303 = vmatprep.subr.mxu0 0.0
    %304 = vmatpush1.msra.mxu0 0.0
    %305 = vmatprep.subr.mxu0 0.0
    %306 = vmatpush1.msra.mxu0 0.0
    %307 = vmatprep.subr.mxu0 0.0
    %308 = vmatpush1.msra.mxu0 0.0
    %309 = vmatprep.subr.mxu0 0.0
    %310 = vmatpush1.msra.mxu0 0.0
    %311 = vmatprep.subr.mxu0 0.0
    %312 = vmatpush1.msra.mxu0 0.0
    %313 = vmatprep.subr.mxu0 0.0
    %314 = vmatpush1.msra.mxu0 0.0
    %315 = vmatprep.subr.mxu0 0.0
    %316 = vmatpush1.msra.mxu0 0.0
    %317 = vmatprep.subr.mxu0 0.0
    %318 = vmatpush1.msra.mxu0 0.0
    %319 = vmatprep.subr.mxu0 0.0
    %320 = vmatpush1.msra.mxu0 0.0
    %321 = vmatprep.mubr.f32.mxu0 0.0
    %322 = vmatmul.mubr.f32.gmra.mrb[0].mxu0 %v252
    %v323 = vpop.f32.mrb[0].mxu0
    %v324 = vadd.f32 0.0, %v323
    %v325 = vpop.f32.mrb[0].mxu0
    %v326 = vadd.f32 0.0, %v325
    %327 = vmatprep.mubr.f32.mxu0 0.0
    %328 = vmatmul.mubr.f32.gmra.mrb[0].mxu0 %v255
    %v329 = vpop.f32.mrb[0].mxu0
    %v330 = vadd.f32 0.0, %v329
    %v331 = vpop.f32.mrb[0].mxu0
    %v332 = vadd.f32 0.0, %v331
    %333 = vdwg.mxu0
    %334 = vmatprep.subr.mxu0 0.0
    %335 = vmatpush1.msra.mxu0 %v247
    %336 = vmatprep.subr.mxu0 0.0
    %337 = vmatpush1.msra.mxu0 %v250
    %338 = vmatprep.subr.mxu0 0.0
    %339 = vmatpush1.msra.mxu0 0.0
    %340 = vmatprep.subr.mxu0 0.0
    %341 = vmatpush1.msra.mxu0 0.0
    %342 = vmatprep.subr.mxu0 0.0
    %343 = vmatpush1.msra.mxu0 0.0
    %344 = vmatprep.subr.mxu0 0.0
    %345 = vmatpush1.msra.mxu0 0.0
    %346 = vmatprep.subr.mxu0 0.0
    %347 = vmatpush1.msra.mxu0 0.0
    %348 = vmatprep.subr.mxu0 0.0
    %349 = vmatpush1.msra.mxu0 0.0
    %350 = vmatprep.subr.mxu0 0.0
    %351 = vmatpush1.msra.mxu0 0.0
    %352 = vmatprep.subr.mxu0 0.0
    %353 = vmatpush1.msra.mxu0 0.0
    %354 = vmatprep.subr.mxu0 0.0
    %355 = vmatpush1.msra.mxu0 0.0
    %356 = vmatprep.subr.mxu0 0.0
    %357 = vmatpush1.msra.mxu0 0.0
    %358 = vmatprep.subr.mxu0 0.0
    %359 = vmatpush1.msra.mxu0 0.0
    %360 = vmatprep.subr.mxu0 0.0
    %361 = vmatpush1.msra.mxu0 0.0
    %362 = vmatprep.subr.mxu0 0.0
    %363 = vmatpush1.msra.mxu0 0.0
    %364 = vmatprep.subr.mxu0 0.0
    %365 = vmatpush1.msra.mxu0 0.0
    %366 = vmatprep.subr.mxu0 0.0
    %367 = vmatpush1.msra.mxu0 0.0
    %368 = vmatprep.subr.mxu0 0.0
    %369 = vmatpush1.msra.mxu0 0.0
    %370 = vmatprep.subr.mxu0 0.0
    %371 = vmatpush1.msra.mxu0 0.0
    %372 = vmatprep.subr.mxu0 0.0
    %373 = vmatpush1.msra.mxu0 0.0
    %374 = vmatprep.subr.mxu0 0.0
    %375 = vmatpush1.msra.mxu0 0.0
    %376 = vmatprep.subr.mxu0 0.0
    %377 = vmatpush1.msra.mxu0 0.0
    %378 = vmatprep.subr.mxu0 0.0
    %379 = vmatpush1.msra.mxu0 0.0
    %380 = vmatprep.subr.mxu0 0.0
    %381 = vmatpush1.msra.mxu0 0.0
    %382 = vmatprep.subr.mxu0 0.0
    %383 = vmatpush1.msra.mxu0 0.0
    %384 = vmatprep.subr.mxu0 0.0
    %385 = vmatpush1.msra.mxu0 0.0
    %386 = vmatprep.subr.mxu0 0.0
    %387 = vmatpush1.msra.mxu0 0.0
    %388 = vmatprep.subr.mxu0 0.0
    %389 = vmatpush1.msra.mxu0 0.0
    %390 = vmatprep.subr.mxu0 0.0
    %391 = vmatpush1.msra.mxu0 0.0
    %392 = vmatprep.subr.mxu0 0.0
    %393 = vmatpush1.msra.mxu0 0.0
    %394 = vmatprep.subr.mxu0 0.0
    %395 = vmatpush1.msra.mxu0 0.0
    %396 = vmatprep.subr.mxu0 0.0
    %397 = vmatpush1.msra.mxu0 0.0
    %398 = vmatprep.mubr.f32.mxu0 0.0
    %399 = vmatmul.mubr.f32.gmra.mrb[0].mxu0 %v252
    %v400 = vpop.f32.mrb[0].mxu0
    %v401 = vadd.f32 0.0, %v400
    %v402 = vpop.f32.mrb[0].mxu0
    %403 = vmatprep.mubr.f32.mxu0 0.0
    %404 = vmatmul.mubr.f32.gmra.mrb[0].mxu0 %v255
    %v405 = vpop.f32.mrb[0].mxu0
    %v406 = vadd.f32 0.0, %v405
    %v407 = vpop.f32.mrb[0].mxu0
    %408 = vdwg.mxu0
    %v409 = vmul.f32 %v160, %v324
    %v410 = vmul.f32 %v162, %v326
    %v411 = vmul.f32 %v237, %v401
    %v412 = vmul.f32 %v166, %v330
    %v413 = vmul.f32 %v168, %v332
    %v414 = vmul.f32 %v242, %v406
    %s415 = scalar_lea.vmem [#allocation7], 48
    %v416 = vld [vmem:[%s415] sm:$0xff]
    %v417 = vld [vmem:[%s415 + $0x8] sm:$0xff]
    %v418 = vld [vmem:[%s415 + $0x10] sm:$0xff]
    %v419 = vld [vmem:[%s415 + $0x18] sm:$0xff]
    %v420 = vld [vmem:[%s415 + $0x20] sm:$0xff]
    %v421 = vld [vmem:[%s415 + $0x28] sm:$0xff]
    %422 = vmatprep.subr.mxu0 %v417
    %423 = vmatpush1.msra.mxu0 %v416
    %424 = vmatprep.subr.mxu0 %v420
    %425 = vmatpush1.msra.mxu0 %v419
    %426 = vmatprep.subr.mxu0 0.0
    %427 = vmatpush1.msra.mxu0 0.0
    %428 = vmatprep.subr.mxu0 0.0
    %429 = vmatpush1.msra.mxu0 0.0
    %430 = vmatprep.subr.mxu0 0.0
    %431 = vmatpush1.msra.mxu0 0.0
    %432 = vmatprep.subr.mxu0 0.0
    %433 = vmatpush1.msra.mxu0 0.0
    %434 = vmatprep.subr.mxu0 0.0
    %435 = vmatpush1.msra.mxu0 0.0
    %436 = vmatprep.subr.mxu0 0.0
    %437 = vmatpush1.msra.mxu0 0.0
    %438 = vmatprep.subr.mxu0 0.0
    %439 = vmatpush1.msra.mxu0 0.0
    %440 = vmatprep.subr.mxu0 0.0
    %441 = vmatpush1.msra.mxu0 0.0
    %442 = vmatprep.subr.mxu0 0.0
    %443 = vmatpush1.msra.mxu0 0.0
    %444 = vmatprep.subr.mxu0 0.0
    %445 = vmatpush1.msra.mxu0 0.0
    %446 = vmatprep.subr.mxu0 0.0
    %447 = vmatpush1.msra.mxu0 0.0
    %448 = vmatprep.subr.mxu0 0.0
    %449 = vmatpush1.msra.mxu0 0.0
    %450 = vmatprep.subr.mxu0 0.0
    %451 = vmatpush1.msra.mxu0 0.0
    %452 = vmatprep.subr.mxu0 0.0
    %453 = vmatpush1.msra.mxu0 0.0
    %454 = vmatprep.subr.mxu0 0.0
    %455 = vmatpush1.msra.mxu0 0.0
    %456 = vmatprep.subr.mxu0 0.0
    %457 = vmatpush1.msra.mxu0 0.0
    %458 = vmatprep.subr.mxu0 0.0
    %459 = vmatpush1.msra.mxu0 0.0
    %460 = vmatprep.subr.mxu0 0.0
    %461 = vmatpush1.msra.mxu0 0.0
    %462 = vmatprep.subr.mxu0 0.0
    %463 = vmatpush1.msra.mxu0 0.0
    %464 = vmatprep.subr.mxu0 0.0
    %465 = vmatpush1.msra.mxu0 0.0
    %466 = vmatprep.subr.mxu0 0.0
    %467 = vmatpush1.msra.mxu0 0.0
    %468 = vmatprep.subr.mxu0 0.0
    %469 = vmatpush1.msra.mxu0 0.0
    %470 = vmatprep.subr.mxu0 0.0
    %471 = vmatpush1.msra.mxu0 0.0
    %472 = vmatprep.subr.mxu0 0.0
    %473 = vmatpush1.msra.mxu0 0.0
    %474 = vmatprep.subr.mxu0 0.0
    %475 = vmatpush1.msra.mxu0 0.0
    %476 = vmatprep.subr.mxu0 0.0
    %477 = vmatpush1.msra.mxu0 0.0
    %478 = vmatprep.subr.mxu0 0.0
    %479 = vmatpush1.msra.mxu0 0.0
    %480 = vmatprep.subr.mxu0 0.0
    %481 = vmatpush1.msra.mxu0 0.0
    %482 = vmatprep.subr.mxu0 0.0
    %483 = vmatpush1.msra.mxu0 0.0
    %484 = vmatprep.subr.mxu0 0.0
    %485 = vmatpush1.msra.mxu0 0.0
    %486 = vmatprep.mubr.f32.mxu0 0.0
    %487 = vmatmul.mubr.f32.gmra.mrb[0].mxu0 %v88
    %v488 = vpop.f32.mrb[0].mxu0
    %v489 = vadd.f32 0.0, %v488
    %v490 = vpop.f32.mrb[0].mxu0
    %v491 = vadd.f32 0.0, %v490
    %492 = vmatprep.mubr.f32.mxu0 0.0
    %493 = vmatmul.mubr.f32.gmra.mrb[0].mxu0 %v91
    %v494 = vpop.f32.mrb[0].mxu0
    %v495 = vadd.f32 0.0, %v494
    %v496 = vpop.f32.mrb[0].mxu0
    %v497 = vadd.f32 0.0, %v496
    %498 = vdwg.mxu0
    %499 = vmatprep.subr.mxu0 0.0
    %500 = vmatpush1.msra.mxu0 %v418
    %501 = vmatprep.subr.mxu0 0.0
    %502 = vmatpush1.msra.mxu0 %v421
    %503 = vmatprep.subr.mxu0 0.0
    %504 = vmatpush1.msra.mxu0 0.0
    %505 = vmatprep.subr.mxu0 0.0
    %506 = vmatpush1.msra.mxu0 0.0
    %507 = vmatprep.subr.mxu0 0.0
    %508 = vmatpush1.msra.mxu0 0.0
    %509 = vmatprep.subr.mxu0 0.0
    %510 = vmatpush1.msra.mxu0 0.0
    %511 = vmatprep.subr.mxu0 0.0
    %512 = vmatpush1.msra.mxu0 0.0
    %513 = vmatprep.subr.mxu0 0.0
    %514 = vmatpush1.msra.mxu0 0.0
    %515 = vmatprep.subr.mxu0 0.0
    %516 = vmatpush1.msra.mxu0 0.0
    %517 = vmatprep.subr.mxu0 0.0
    %518 = vmatpush1.msra.mxu0 0.0
    %519 = vmatprep.subr.mxu0 0.0
    %520 = vmatpush1.msra.mxu0 0.0
    %521 = vmatprep.subr.mxu0 0.0
    %522 = vmatpush1.msra.mxu0 0.0
    %523 = vmatprep.subr.mxu0 0.0
    %524 = vmatpush1.msra.mxu0 0.0
    %525 = vmatprep.subr.mxu0 0.0
    %526 = vmatpush1.msra.mxu0 0.0
    %527 = vmatprep.subr.mxu0 0.0
    %528 = vmatpush1.msra.mxu0 0.0
    %529 = vmatprep.subr.mxu0 0.0
    %530 = vmatpush1.msra.mxu0 0.0
    %531 = vmatprep.subr.mxu0 0.0
    %532 = vmatpush1.msra.mxu0 0.0
    %533 = vmatprep.subr.mxu0 0.0
    %534 = vmatpush1.msra.mxu0 0.0
    %535 = vmatprep.subr.mxu0 0.0
    %536 = vmatpush1.msra.mxu0 0.0
    %537 = vmatprep.subr.mxu0 0.0
    %538 = vmatpush1.msra.mxu0 0.0
    %539 = vmatprep.subr.mxu0 0.0
    %540 = vmatpush1.msra.mxu0 0.0
    %541 = vmatprep.subr.mxu0 0.0
    %542 = vmatpush1.msra.mxu0 0.0
    %543 = vmatprep.subr.mxu0 0.0
    %544 = vmatpush1.msra.mxu0 0.0
    %545 = vmatprep.subr.mxu0 0.0
    %546 = vmatpush1.msra.mxu0 0.0
    %547 = vmatprep.subr.mxu0 0.0
    %548 = vmatpush1.msra.mxu0 0.0
    %549 = vmatprep.subr.mxu0 0.0
    %550 = vmatpush1.msra.mxu0 0.0
    %551 = vmatprep.subr.mxu0 0.0
    %552 = vmatpush1.msra.mxu0 0.0
    %553 = vmatprep.subr.mxu0 0.0
    %554 = vmatpush1.msra.mxu0 0.0
    %555 = vmatprep.subr.mxu0 0.0
    %556 = vmatpush1.msra.mxu0 0.0
    %557 = vmatprep.subr.mxu0 0.0
    %558 = vmatpush1.msra.mxu0 0.0
    %559 = vmatprep.subr.mxu0 0.0
    %560 = vmatpush1.msra.mxu0 0.0
    %561 = vmatprep.subr.mxu0 0.0
    %562 = vmatpush1.msra.mxu0 0.0
    %563 = vmatprep.mubr.f32.mxu0 0.0
    %564 = vmatmul.mubr.f32.gmra.mrb[0].mxu0 %v88
    %v565 = vpop.f32.mrb[0].mxu0
    %v566 = vadd.f32 0.0, %v565
    %v567 = vpop.f32.mrb[0].mxu0
    %568 = vmatprep.mubr.f32.mxu0 0.0
    %569 = vmatmul.mubr.f32.gmra.mrb[0].mxu0 %v91
    %v570 = vpop.f32.mrb[0].mxu0
    %v571 = vadd.f32 0.0, %v570
    %v572 = vpop.f32.mrb[0].mxu0
    %573 = vdwg.mxu0
    %s574 = scalar_lea.vmem [#allocation8], 48
    %v575 = vld [vmem:[%s574] sm:$0xff]
    %v576 = vld [vmem:[%s574 + $0x8] sm:$0xff]
    %v577 = vld [vmem:[%s574 + $0x10] sm:$0xff]
    %v578 = vld [vmem:[%s574 + $0x18] sm:$0xff]
    %v579 = vld [vmem:[%s574 + $0x20] sm:$0xff]
    %v580 = vld [vmem:[%s574 + $0x28] sm:$0xff]
    %581 = vmatprep.subr.mxu0 %v576
    %582 = vmatpush1.msra.mxu0 %v575
    %583 = vmatprep.subr.mxu0 %v579
    %584 = vmatpush1.msra.mxu0 %v578
    %585 = vmatprep.subr.mxu0 0.0
    %586 = vmatpush1.msra.mxu0 0.0
    %587 = vmatprep.subr.mxu0 0.0
    %588 = vmatpush1.msra.mxu0 0.0
    %589 = vmatprep.subr.mxu0 0.0
    %590 = vmatpush1.msra.mxu0 0.0
    %591 = vmatprep.subr.mxu0 0.0
    %592 = vmatpush1.msra.mxu0 0.0
    %593 = vmatprep.subr.mxu0 0.0
    %594 = vmatpush1.msra.mxu0 0.0
    %595 = vmatprep.subr.mxu0 0.0
    %596 = vmatpush1.msra.mxu0 0.0
    %597 = vmatprep.subr.mxu0 0.0
    %598 = vmatpush1.msra.mxu0 0.0
    %599 = vmatprep.subr.mxu0 0.0
    %600 = vmatpush1.msra.mxu0 0.0
    %601 = vmatprep.subr.mxu0 0.0
    %602 = vmatpush1.msra.mxu0 0.0
    %603 = vmatprep.subr.mxu0 0.0
    %604 = vmatpush1.msra.mxu0 0.0
    %605 = vmatprep.subr.mxu0 0.0
    %606 = vmatpush1.msra.mxu0 0.0
    %607 = vmatprep.subr.mxu0 0.0
    %608 = vmatpush1.msra.mxu0 0.0
    %609 = vmatprep.subr.mxu0 0.0
    %610 = vmatpush1.msra.mxu0 0.0
    %611 = vmatprep.subr.mxu0 0.0
    %612 = vmatpush1.msra.mxu0 0.0
    %613 = vmatprep.subr.mxu0 0.0
    %614 = vmatpush1.msra.mxu0 0.0
    %615 = vmatprep.subr.mxu0 0.0
    %616 = vmatpush1.msra.mxu0 0.0
    %617 = vmatprep.subr.mxu0 0.0
    %618 = vmatpush1.msra.mxu0 0.0
    %619 = vmatprep.subr.mxu0 0.0
    %620 = vmatpush1.msra.mxu0 0.0
    %621 = vmatprep.subr.mxu0 0.0
    %622 = vmatpush1.msra.mxu0 0.0
    %623 = vmatprep.subr.mxu0 0.0
    %624 = vmatpush1.msra.mxu0 0.0
    %625 = vmatprep.subr.mxu0 0.0
    %626 = vmatpush1.msra.mxu0 0.0
    %627 = vmatprep.subr.mxu0 0.0
    %628 = vmatpush1.msra.mxu0 0.0
    %629 = vmatprep.subr.mxu0 0.0
    %630 = vmatpush1.msra.mxu0 0.0
    %631 = vmatprep.subr.mxu0 0.0
    %632 = vmatpush1.msra.mxu0 0.0
    %633 = vmatprep.subr.mxu0 0.0
    %634 = vmatpush1.msra.mxu0 0.0
    %635 = vmatprep.subr.mxu0 0.0
    %636 = vmatpush1.msra.mxu0 0.0
    %637 = vmatprep.subr.mxu0 0.0
    %638 = vmatpush1.msra.mxu0 0.0
    %639 = vmatprep.subr.mxu0 0.0
    %640 = vmatpush1.msra.mxu0 0.0
    %641 = vmatprep.subr.mxu0 0.0
    %642 = vmatpush1.msra.mxu0 0.0
    %643 = vmatprep.subr.mxu0 0.0
    %644 = vmatpush1.msra.mxu0 0.0
    %645 = vmatprep.mubr.f32.mxu0 0.0
    %646 = vmatmul.mubr.f32.gmra.mrb[0].mxu0 %v252
    %v647 = vpop.f32.mrb[0].mxu0
    %v648 = vadd.f32 0.0, %v647
    %v649 = vpop.f32.mrb[0].mxu0
    %v650 = vadd.f32 0.0, %v649
    %651 = vmatprep.mubr.f32.mxu0 0.0
    %652 = vmatmul.mubr.f32.gmra.mrb[0].mxu0 %v255
    %v653 = vpop.f32.mrb[0].mxu0
    %v654 = vadd.f32 0.0, %v653
    %v655 = vpop.f32.mrb[0].mxu0
    %v656 = vadd.f32 0.0, %v655
    %657 = vdwg.mxu0
    %658 = vmatprep.subr.mxu0 0.0
    %659 = vmatpush1.msra.mxu0 %v577
    %660 = vmatprep.subr.mxu0 0.0
    %661 = vmatpush1.msra.mxu0 %v580
    %662 = vmatprep.subr.mxu0 0.0
    %663 = vmatpush1.msra.mxu0 0.0
    %664 = vmatprep.subr.mxu0 0.0
    %665 = vmatpush1.msra.mxu0 0.0
    %666 = vmatprep.subr.mxu0 0.0
    %667 = vmatpush1.msra.mxu0 0.0
    %668 = vmatprep.subr.mxu0 0.0
    %669 = vmatpush1.msra.mxu0 0.0
    %670 = vmatprep.subr.mxu0 0.0
    %671 = vmatpush1.msra.mxu0 0.0
    %672 = vmatprep.subr.mxu0 0.0
    %673 = vmatpush1.msra.mxu0 0.0
    %674 = vmatprep.subr.mxu0 0.0
    %675 = vmatpush1.msra.mxu0 0.0
    %676 = vmatprep.subr.mxu0 0.0
    %677 = vmatpush1.msra.mxu0 0.0
    %678 = vmatprep.subr.mxu0 0.0
    %679 = vmatpush1.msra.mxu0 0.0
    %680 = vmatprep.subr.mxu0 0.0
    %681 = vmatpush1.msra.mxu0 0.0
    %682 = vmatprep.subr.mxu0 0.0
    %683 = vmatpush1.msra.mxu0 0.0
    %684 = vmatprep.subr.mxu0 0.0
    %685 = vmatpush1.msra.mxu0 0.0
    %686 = vmatprep.subr.mxu0 0.0
    %687 = vmatpush1.msra.mxu0 0.0
    %688 = vmatprep.subr.mxu0 0.0
    %689 = vmatpush1.msra.mxu0 0.0
    %690 = vmatprep.subr.mxu0 0.0
    %691 = vmatpush1.msra.mxu0 0.0
    %692 = vmatprep.subr.mxu0 0.0
    %693 = vmatpush1.msra.mxu0 0.0
    %694 = vmatprep.subr.mxu0 0.0
    %695 = vmatpush1.msra.mxu0 0.0
    %696 = vmatprep.subr.mxu0 0.0
    %697 = vmatpush1.msra.mxu0 0.0
    %698 = vmatprep.subr.mxu0 0.0
    %699 = vmatpush1.msra.mxu0 0.0
    %700 = vmatprep.subr.mxu0 0.0
    %701 = vmatpush1.msra.mxu0 0.0
    %702 = vmatprep.subr.mxu0 0.0
    %703 = vmatpush1.msra.mxu0 0.0
    %704 = vmatprep.subr.mxu0 0.0
    %705 = vmatpush1.msra.mxu0 0.0
    %706 = vmatprep.subr.mxu0 0.0
    %707 = vmatpush1.msra.mxu0 0.0
    %708 = vmatprep.subr.mxu0 0.0
    %709 = vmatpush1.msra.mxu0 0.0
    %710 = vmatprep.subr.mxu0 0.0
    %711 = vmatpush1.msra.mxu0 0.0
    %712 = vmatprep.subr.mxu0 0.0
    %713 = vmatpush1.msra.mxu0 0.0
    %714 = vmatprep.subr.mxu0 0.0
    %715 = vmatpush1.msra.mxu0 0.0
    %716 = vmatprep.subr.mxu0 0.0
    %717 = vmatpush1.msra.mxu0 0.0
    %718 = vmatprep.subr.mxu0 0.0
    %719 = vmatpush1.msra.mxu0 0.0
    %720 = vmatprep.subr.mxu0 0.0
    %721 = vmatpush1.msra.mxu0 0.0
    %722 = vmatprep.mubr.f32.mxu0 0.0
    %723 = vmatmul.mubr.f32.gmra.mrb[0].mxu0 %v252
    %v724 = vpop.f32.mrb[0].mxu0
    %v725 = vadd.f32 0.0, %v724
    %v726 = vpop.f32.mrb[0].mxu0
    %727 = vmatprep.mubr.f32.mxu0 0.0
    %728 = vmatmul.mubr.f32.gmra.mrb[0].mxu0 %v255
    %v729 = vpop.f32.mrb[0].mxu0
    %v730 = vadd.f32 0.0, %v729
    %v731 = vpop.f32.mrb[0].mxu0
    %732 = vdwg.mxu0
    %v733 = vmul.f32 %v489, %v648
    %v734 = vmul.f32 %v491, %v650
    %v735 = vmul.f32 %v566, %v725
    %v736 = vmul.f32 %v495, %v654
    %v737 = vmul.f32 %v497, %v656
    %v738 = vmul.f32 %v571, %v730
    %v739 = vadd.f32 %v409, %v733
    %v740 = vadd.f32 %v410, %v734
    %v741 = vadd.f32 %v411, %v735
    %v742 = vadd.f32 %v412, %v736
    %v743 = vadd.f32 %v413, %v737
    %v744 = vadd.f32 %v414, %v738
    %745 = vst [vmem:[#allocation10] sm:$0xff] %v739
    %vm746 = vcmask 523264
    %747 = vst.msk [vmem:[#allocation10 + $0x8] sm:$0xff] %vm746, %v740
    %748 = vst [vmem:[#allocation10 + $0x10] sm:$0xff] %v742
    %749 = vst.msk [vmem:[#allocation10 + $0x18] sm:$0xff] %vm746, %v743
    %750 = vst.msk [vmem:[#allocation11] sm:$0xff] %vm86, %v741
    %751 = vst.msk [vmem:[#allocation11 + $0x8] sm:$0xff] %vm86, %v744
    // Predicated region
    $region34: #{tpu_custom_call.1} parent=1 // pred_check
      _
    $region35: #{tpu_custom_call.1} parent=1 // pred_check_branch
      %753 = sbr.rel (0) target = $region37
    $region36: #{tpu_custom_call.1} parent=1 // pred_region
      %s755 = ssub.s32 512, 512
      %756 = vsyncadd [#allocation4], %s755
      %s757 = sshll.u32 [#allocation10], 4
      %s758 = int_to_ptr.vmem [resolvable:$true] %s757
      %763 = dma.vmem_to_hbm [thread:$0]  %s758, 512, %s4, [#allocation4], 256, 256, 16
    $region37: #{tpu_custom_call.1} parent=1 // pred_fallthru
      _
    // Predicated region
    $region38: #{tpu_custom_call.1} parent=1 // pred_check
      _
    $region39: #{tpu_custom_call.1} parent=1 // pred_check_branch
      %765 = sbr.rel (0) target = $region41
    $region40: #{tpu_custom_call.1} parent=1 // pred_region
      %s767 = ssub.s32 256, 256
      %768 = vsyncadd [#allocation12], %s767
      %s769 = sshll.u32 [#allocation11], 4
      %s770 = int_to_ptr.vmem [resolvable:$true] %s769
      %775 = dma.vmem_to_hbm [thread:$0]  %s770, 256, %s5, [#allocation12], 128, 128, 8
    $region41: #{tpu_custom_call.1} parent=1 // pred_fallthru
      _
    // Predicated region
    $region42: #{tpu_custom_call.1} parent=1 // pred_check
      _
    $region43: #{tpu_custom_call.1} parent=1 // pred_check_branch
      %777 = sbr.rel (0) target = $region45
    $region44: #{tpu_custom_call.1} parent=1 // pred_region
      %778 = dma.done [#allocation4], 512
    $region45: #{tpu_custom_call.1} parent=1 // pred_fallthru
      _
    // Predicated region
    $region46: #{tpu_custom_call.1} parent=1 // pred_check
      _
    $region47: #{tpu_custom_call.1} parent=1 // pred_check_branch
      %780 = sbr.rel (0) target = $region49
    $region48: #{tpu_custom_call.1} parent=1 // pred_region
      %781 = dma.done [#allocation12], 256
    $region49: #{tpu_custom_call.1} parent=1 // pred_fallthru
      _
    %782 = vsyncpa [#allocation3], 1
    %783 = vsyncpa [#allocation6], 1
    %784 = vsyncpa [#allocation9], 1
    %785 = vsyncpa [#allocation4], 1
    %786 = vsyncpa [#allocation12], 1

</llo_original>
